<compile_context>
chip_gen: v5e
topology: v5e:2x2
jax: 0.10.0
libtpu: 0.0.40
codegen_flags: <defaults>
</compile_context>

<pallas_src>
import jax
import jax.numpy as jnp
import numpy as np
from jax.experimental import pallas as pl
from jax.experimental.pallas import tpu as pltpu


def _classifier_kernel(h_ref, wt_ref, bt_ref, wb_ref, bb_ref, out_ref):
    """out = relu(h @ Wt + bt) @ Wb + bb  for one (Bt, E) batch block."""
    h = h_ref[...]                                           # (Bt, E)  f32
    mid = jnp.dot(h, wt_ref[...],
                  preferred_element_type=jnp.float32) + bt_ref[...]   # (Bt, H)
    mid = jnp.maximum(mid, 0.0)                              # ReLU (VPU, f32)
    out = jnp.dot(mid, wb_ref[...],
                  preferred_element_type=jnp.float32) + bb_ref[...]   # (Bt, T)
    out_ref[...] = out.astype(out_ref.dtype)


def classifier_forward(hidden, params, *, batch_block=128):
    """Pallas forward of Classifier: hidden (B, E) -> logits (B, T)."""
    wt, bt = params["top_w"], params["top_b"]        # (E, H), (1, H)
    wb, bb = params["bottom_w"], params["bottom_b"]  # (H, T), (1, T)
    B, E = hidden.shape
    H = wt.shape[1]
    T = wb.shape[1]

    # Pick a batch block; pad B up so the grid tiles evenly.
    Bt = B if B <= batch_block else batch_block
    pad = (-B) % Bt
    if pad:
        hidden = jnp.pad(hidden, ((0, pad), (0, 0)))
    Bp = B + pad
    nb = Bp // Bt

    def full_spec(a):
        nd = a.ndim
        return pl.BlockSpec(a.shape, lambda b, nd=nd: (0,) * nd)

    grid_spec = pltpu.PrefetchScalarGridSpec(
        num_scalar_prefetch=0,
        grid=(nb,),
        in_specs=[
            pl.BlockSpec((Bt, E), lambda b: (b, 0)),   # hidden batch block
            full_spec(wt), full_spec(bt),              # top Linear (resident)
            full_spec(wb), full_spec(bb),              # bottom Linear (resident)
        ],
        out_specs=pl.BlockSpec((Bt, T), lambda b: (b, 0)),
    )

    out = pl.pallas_call(
        _classifier_kernel,
        out_shape=jax.ShapeDtypeStruct((Bp, T), jnp.float32),
        grid_spec=grid_spec,
        compiler_params=pltpu.CompilerParams(
            dimension_semantics=("parallel",),          # batch blocks independent
            vmem_limit_bytes=32 * 1024 * 1024),
    )(hidden, wt, bt, wb, bb)

    return out[:B] if pad else out


def init_params(key, embed_dim, hidden_dim, target_size):
    k1, k2, k3, k4 = jax.random.split(key, 4)

    def linear(kw, kb, din, dout):
        bound = 1.0 / np.sqrt(float(din))                # nn.Linear default init
        w = jax.random.uniform(kw, (din, dout), jnp.float32, -bound, bound)
        b = jax.random.uniform(kb, (1, dout), jnp.float32, -bound, bound)
        return w, b

    p = {}
    p["top_w"], p["top_b"] = linear(k1, k2, embed_dim, hidden_dim)
    p["bottom_w"], p["bottom_b"] = linear(k3, k4, hidden_dim, target_size)
    return p


def classifier_reference(hidden, params):
    mid = jnp.maximum(hidden @ params["top_w"] + params["top_b"], 0.0)
    return mid @ params["bottom_w"] + params["bottom_b"]


if __name__ == "__main__":
    embed_dim, hidden_dim, target_size = 32, 32, 6
    B = 2

    key = jax.random.PRNGKey(0)
    pkey, hkey = jax.random.split(key)
    params = init_params(pkey, embed_dim, hidden_dim, target_size)
    hidden = jax.random.normal(hkey, (B, embed_dim), jnp.float32)

    logits = classifier_forward(hidden, params)
    logits = jax.block_until_ready(logits)

    assert logits.shape == (B, target_size)
    ref = jax.block_until_ready(classifier_reference(hidden, params))
    np.testing.assert_allclose(np.asarray(logits), np.asarray(ref),
                               rtol=2e-2, atol=2e-2)
    print("KERNEL_OK")
</pallas_src>

<mosaic_0001>
module attributes {stable_mosaic.version = 11 : i64} {
  func.func @_classifier_kernel(%arg0: i32, %arg1: memref<2x32xf32, #tpu.memory_space<vmem>>, %arg2: memref<32x32xf32, #tpu.memory_space<vmem>>, %arg3: memref<1x32xf32, #tpu.memory_space<vmem>>, %arg4: memref<32x6xf32, #tpu.memory_space<vmem>>, %arg5: memref<1x6xf32, #tpu.memory_space<vmem>>, %arg6: memref<2x6xf32, #tpu.memory_space<vmem>>) attributes {dimension_semantics = [#tpu.dimension_semantics<parallel>], iteration_bounds = array<i64: 1>, scalar_prefetch = 0 : i64, scratch_operands = 0 : i64, tpu.core_type = #tpu.core_type<tc>, window_params = [{transform_indices = @transform_0, window_bounds = array<i64: 2, 32>}, {pipeline_mode = #tpu.pipeline_mode<synchronous>, transform_indices = @transform_1, window_bounds = array<i64: 32, 32>}, {pipeline_mode = #tpu.pipeline_mode<synchronous>, transform_indices = @transform_2, window_bounds = array<i64: 1, 32>}, {pipeline_mode = #tpu.pipeline_mode<synchronous>, transform_indices = @transform_3, window_bounds = array<i64: 32, 6>}, {pipeline_mode = #tpu.pipeline_mode<synchronous>, transform_indices = @transform_4, window_bounds = array<i64: 1, 6>}, {transform_indices = @transform_5, window_bounds = array<i64: 2, 6>}]} {
    %c0 = arith.constant 0 : index
    %c0_0 = arith.constant 0 : index
    %0 = vector.load %arg1[%c0, %c0_0] : memref<2x32xf32, #tpu.memory_space<vmem>>, vector<2x32xf32>
    %c0_1 = arith.constant 0 : index
    %c0_2 = arith.constant 0 : index
    %1 = vector.load %arg2[%c0_1, %c0_2] : memref<32x32xf32, #tpu.memory_space<vmem>>, vector<32x32xf32>
    %cst = arith.constant dense<0.000000e+00> : vector<2x32xf32>
    %2 = tpu.matmul %0, %1, %cst {dimension_numbers = #tpu.dot_dimension_numbers<[1], [0], [0], [1], [0, 0, 1, 1], [], []>} : vector<2x32xf32>, vector<32x32xf32>, vector<2x32xf32> -> vector<2x32xf32>
    %c0_3 = arith.constant 0 : index
    %c0_4 = arith.constant 0 : index
    %3 = vector.load %arg3[%c0_3, %c0_4] : memref<1x32xf32, #tpu.memory_space<vmem>>, vector<1x32xf32>
    %4 = vector.broadcast %3 : vector<1x32xf32> to vector<2x32xf32>
    %5 = arith.addf %2, %4 : vector<2x32xf32>
    %cst_5 = arith.constant 0.000000e+00 : f32
    %6 = vector.broadcast %cst_5 : f32 to vector<2x32xf32>
    %7 = arith.maximumf %5, %6 : vector<2x32xf32>
    %c0_6 = arith.constant 0 : index
    %c0_7 = arith.constant 0 : index
    %8 = vector.load %arg4[%c0_6, %c0_7] : memref<32x6xf32, #tpu.memory_space<vmem>>, vector<32x6xf32>
    %cst_8 = arith.constant dense<0.000000e+00> : vector<2x6xf32>
    %9 = tpu.matmul %7, %8, %cst_8 {dimension_numbers = #tpu.dot_dimension_numbers<[1], [0], [0], [1], [0, 0, 1, 1], [], []>} : vector<2x32xf32>, vector<32x6xf32>, vector<2x6xf32> -> vector<2x6xf32>
    %c0_9 = arith.constant 0 : index
    %c0_10 = arith.constant 0 : index
    %10 = vector.load %arg5[%c0_9, %c0_10] : memref<1x6xf32, #tpu.memory_space<vmem>>, vector<1x6xf32>
    %11 = vector.broadcast %10 : vector<1x6xf32> to vector<2x6xf32>
    %12 = arith.addf %9, %11 : vector<2x6xf32>
    %c0_11 = arith.constant 0 : index
    %c0_12 = arith.constant 0 : index
    %13 = vector.load %arg6[%c0_11, %c0_12] : memref<2x6xf32, #tpu.memory_space<vmem>>, vector<2x6xf32>
    tpu.vector_store %arg6[%c0_11, %c0_12], %12 {strides = array<i32>} : memref<2x6xf32, #tpu.memory_space<vmem>>, vector<2x6xf32>,
    return
  }
  func.func @transform_0(%arg0: i32) -> (i32, i32) {
    %c0_i32 = arith.constant 0 : i32
    %c0_i32_0 = arith.constant 0 : i32
    return %arg0, %c0_i32 : i32, i32
  }
  func.func @transform_1(%arg0: i32) -> (i32, i32) {
    %c0_i32 = arith.constant 0 : i32
    %c0_i32_0 = arith.constant 0 : i32
    %c0_i32_1 = arith.constant 0 : i32
    return %c0_i32, %c0_i32_0 : i32, i32
  }
  func.func @transform_2(%arg0: i32) -> (i32, i32) {
    %c0_i32 = arith.constant 0 : i32
    %c0_i32_0 = arith.constant 0 : i32
    %c0_i32_1 = arith.constant 0 : i32
    return %c0_i32, %c0_i32_0 : i32, i32
  }
  func.func @transform_3(%arg0: i32) -> (i32, i32) {
    %c0_i32 = arith.constant 0 : i32
    %c0_i32_0 = arith.constant 0 : i32
    %c0_i32_1 = arith.constant 0 : i32
    return %c0_i32, %c0_i32_0 : i32, i32
  }
  func.func @transform_4(%arg0: i32) -> (i32, i32) {
    %c0_i32 = arith.constant 0 : i32
    %c0_i32_0 = arith.constant 0 : i32
    %c0_i32_1 = arith.constant 0 : i32
    return %c0_i32, %c0_i32_0 : i32, i32
  }
  func.func @transform_5(%arg0: i32) -> (i32, i32) {
    %c0_i32 = arith.constant 0 : i32
    %c0_i32_0 = arith.constant 0 : i32
    return %arg0, %c0_i32 : i32, i32
  }
}

</mosaic_0001>

<llo_original>
// kernel: tpu_custom_call.1
$region0: #{tpu_custom_call.1}
  #allocation0 [shape = 'u32[]', space=smem, size = 0x4, offset = 0x4, fixed_abs, tag = 'smem constant byte address 0x4 - core index']
  #allocation1 [shape = 'u32[72,128]{1,0:T(1,128)}', space=vmem, size = 0x9000, scoped, tag = 'internal scratch']
  %s0 = inlined_call_operand.vmem [shape: f32[2,32], index: 0, kind: input, shape index: {}]
  %s1 = inlined_call_operand.vmem [shape: f32[32,32], index: 1, kind: input, shape index: {}]
  %s2 = inlined_call_operand.vmem [shape: f32[1,32], index: 2, kind: input, shape index: {}]
  %s3 = inlined_call_operand.vmem [shape: f32[32,6], index: 3, kind: input, shape index: {}]
  %s4 = inlined_call_operand.vmem [shape: f32[1,6], index: 4, kind: input, shape index: {}]
  %s5 = inlined_call_operand.hbm [shape: f32[2,6], index: 5, kind: output, shape index: {}]
  %s6 = sld [smem:[#allocation0]]
  $region30: #{tpu_custom_call.1} parent=0
    _
  %s8 = ssub.s32 1, %s6
  %s9 = scalar_select 0, %s8, %s6
  $region1: #{tpu_custom_call.1} parent=0
    #allocation2 [shape = 'u8[1024]{0}', space=vmem, size = 0x400, scoped, tag = 'output window, operand 0, single buffered']
    #allocation3 [shape = 's32[1]{0}', space=sflag, size = 0x4, scoped, tag = 'scoped memory for tpu_custom_call.1']
    %10 = vsyncpa [#allocation3], 0
    // Predicated region
    $region2: #{tpu_custom_call.1} parent=1 // pred_check
      _
    $region3: #{tpu_custom_call.1} parent=1 // pred_check_branch
      %12 = sbr.rel (0) target = $region5
    $region4: #{tpu_custom_call.1} parent=1 // pred_region
      _
    $region5: #{tpu_custom_call.1} parent=1 // pred_fallthru
      _
    // Predicated region
    $region6: #{tpu_custom_call.1} parent=1 // pred_check
      _
    $region7: #{tpu_custom_call.1} parent=1 // pred_check_branch
      %14 = sbr.rel (0) target = $region9
    $region8: #{tpu_custom_call.1} parent=1 // pred_region
      _
    $region9: #{tpu_custom_call.1} parent=1 // pred_fallthru
      _
    // Predicated region
    $region10: #{tpu_custom_call.1} parent=1 // pred_check
      _
    $region11: #{tpu_custom_call.1} parent=1 // pred_check_branch
      %16 = sbr.rel (0) target = $region13
    $region12: #{tpu_custom_call.1} parent=1 // pred_region
      _
    $region13: #{tpu_custom_call.1} parent=1 // pred_fallthru
      _
    // Predicated region
    $region14: #{tpu_custom_call.1} parent=1 // pred_check
      _
    $region15: #{tpu_custom_call.1} parent=1 // pred_check_branch
      %18 = sbr.rel (0) target = $region17
    $region16: #{tpu_custom_call.1} parent=1 // pred_region
      _
    $region17: #{tpu_custom_call.1} parent=1 // pred_fallthru
      _
    // Predicated region
    $region18: #{tpu_custom_call.1} parent=1 // pred_check
      _
    $region19: #{tpu_custom_call.1} parent=1 // pred_check_branch
      %20 = sbr.rel (0) target = $region21
    $region20: #{tpu_custom_call.1} parent=1 // pred_region
      _
    $region21: #{tpu_custom_call.1} parent=1 // pred_fallthru
      _
    %v21 = vld [vmem:[%s0] sm:$0x3]
    %v22 = vld [vmem:[%s1] sm:$0xff]
    %v23 = vld [vmem:[%s1 + $0x8] sm:$0xff]
    %v24 = vld [vmem:[%s1 + $0x10] sm:$0xff]
    %v25 = vld [vmem:[%s1 + $0x18] sm:$0xff]
    %v26 = vld [vmem:[%s2] sm:$0x1]
    %v28 = vperm.slane %v26, 0
    %vm30 = vcmask 261120
    %v32 = vsel %vm30, %v21, 0
    %34 = vmatpush.msra.mxu0 0.0
    %35 = vmatpush.msra.mxu0 0.0
    %36 = vmatpush.msra.mxu0 0.0
    %37 = vmatpush.msra.mxu0 0.0
    %38 = vmatpush.msra.mxu0 0.0
    %39 = vmatpush.msra.mxu0 0.0
    %40 = vmatpush.msra.mxu0 0.0
    %41 = vmatpush.msra.mxu0 0.0
    %42 = vmatpush.msra.mxu0 0.0
    %43 = vmatpush.msra.mxu0 0.0
    %44 = vmatpush.msra.mxu0 0.0
    %45 = vmatpush.msra.mxu0 0.0
    %46 = vmatpush.msra.mxu0 %v25
    %47 = vmatpush.msra.mxu0 %v24
    %48 = vmatpush.msra.mxu0 %v23
    %49 = vmatpush.msra.mxu0 %v22
    %50 = vmatmul.f32.gmra.mxu0 %v32
    %v51 = vpop.f32.mrf.mxu0
    %v52 = vadd.f32 %v28, %v51
    %53 = vdwg.mxu0
    %v54 = vmax.f32 %v52, 0.0
    %v55 = vld [vmem:[%s3] sm:$0xff]
    %v56 = vld [vmem:[%s3 + $0x8] sm:$0xff]
    %v57 = vld [vmem:[%s3 + $0x10] sm:$0xff]
    %v58 = vld [vmem:[%s3 + $0x18] sm:$0xff]
    %v59 = vld [vmem:[%s4] sm:$0x1]
    %v61 = vperm.slane %v59, 0
    %v64 = vsel %vm30, %v54, 0
    %66 = vmatpush.msra.mxu0 0.0
    %67 = vmatpush.msra.mxu0 0.0
    %68 = vmatpush.msra.mxu0 0.0
    %69 = vmatpush.msra.mxu0 0.0
    %70 = vmatpush.msra.mxu0 0.0
    %71 = vmatpush.msra.mxu0 0.0
    %72 = vmatpush.msra.mxu0 0.0
    %73 = vmatpush.msra.mxu0 0.0
    %74 = vmatpush.msra.mxu0 0.0
    %75 = vmatpush.msra.mxu0 0.0
    %76 = vmatpush.msra.mxu0 0.0
    %77 = vmatpush.msra.mxu0 0.0
    %78 = vmatpush.msra.mxu0 %v58
    %79 = vmatpush.msra.mxu0 %v57
    %80 = vmatpush.msra.mxu0 %v56
    %81 = vmatpush.msra.mxu0 %v55
    %82 = vmatmul.f32.gmra.mxu0 %v64
    %v83 = vpop.f32.mrf.mxu0
    %v84 = vadd.f32 %v61, %v83
    %85 = vdwg.mxu0
    %vm86 = vcmask 41984
    %87 = vst.msk [vmem:[#allocation2] sm:$0x3] %vm86, %v84
    // Predicated region
    $region22: #{tpu_custom_call.1} parent=1 // pred_check
      _
    $region23: #{tpu_custom_call.1} parent=1 // pred_check_branch
      %89 = sbr.rel (0) target = $region25
    $region24: #{tpu_custom_call.1} parent=1 // pred_region
      %91 = vsyncadd [#allocation3], 0
      %s93 = sshll.u32 [#allocation2], 4
      %s94 = int_to_ptr.vmem [resolvable:$true] %s93
      %s95 = sshll.u32 %s5, 4
      %s96 = int_to_ptr.hbm [resolvable:$true] %s95
      %98 = dma.vmem_to_hbm [thread:$0]  %s94, 32, %s96, [#allocation3]
    $region25: #{tpu_custom_call.1} parent=1 // pred_fallthru
      _
    // Predicated region
    $region26: #{tpu_custom_call.1} parent=1 // pred_check
      _
    $region27: #{tpu_custom_call.1} parent=1 // pred_check_branch
      %100 = sbr.rel (0) target = $region29
    $region28: #{tpu_custom_call.1} parent=1 // pred_region
      %102 = dma.done [#allocation3], 32
    $region29: #{tpu_custom_call.1} parent=1 // pred_fallthru
      _
    %103 = vsyncpa [#allocation3], 1

</llo_original>
